<compile_context>
chip_gen: v6e
topology: v6e:2x2x1
jax: 0.10.0
libtpu: 0.0.40
codegen_flags: <defaults>
</compile_context>

<pallas_src>
import functools
import math

import jax
import jax.numpy as jnp
from jax.experimental import pallas as pl
from jax.experimental.pallas import tpu as pltpu


# ----------------------------- tiling helpers ------------------------------

def _pick_tile(dim, prefs):
    """Largest preferred tile that evenly divides `dim`, else the full dim.

    Falling back to the full dim always satisfies the TPU (8,128)-or-full-dim rule.
    """
    for p in prefs:
        if dim >= p and dim % p == 0:
            return p
    return dim


def _vmem_limit_bytes(*tiles):
    """Derive a portable vmem limit from the per-grid-step tile footprint.

    2x for double-buffered pipelining + 8 MiB headroom for Mosaic internal scratch,
    floored at 16 MiB and capped at 48 MiB (safe on v7x's 64 MiB VMEM per core).
    """
    per_step = 0
    for shape, dtype in tiles:
        per_step += int(math.prod(shape)) * jnp.dtype(dtype).itemsize
    need = 2 * per_step + (8 << 20)
    return int(min(max(need, 16 << 20), 48 << 20))


def _heads_per_block(nH, dh, S):
    """Heads grouped per attention block.

    For moderate S pack every head into one block (grid B x 1, big lane-dense DMAs);
    for long sequences fall back to 128-lane head groups to bound per-step VMEM.
    """
    if S <= 512:
        return nH
    if dh <= 128 and 128 % dh == 0:
        g = 128 // dh
        if nH % g == 0:
            return g
    return nH


# ----------------------- GELU capability probe (erf) -----------------------

_GELU_ACT = None


def _gelu_act():
    """Prefer exact erf-GELU (matches torch/HF BERT); fall back to tanh approx."""
    global _GELU_ACT
    if _GELU_ACT is None:
        def _probe(x_ref, o_ref):
            o_ref[...] = jax.lax.erf(x_ref[...])
        try:
            jax.block_until_ready(
                pl.pallas_call(
                    _probe,
                    out_shape=jax.ShapeDtypeStruct((8, 128), jnp.float32),
                )(jnp.ones((8, 128), jnp.float32)))
            _GELU_ACT = "gelu_erf"
        except Exception:
            # TODO(synk): lax.erf did not lower in this Mosaic build; using tanh-approx GELU.
            _GELU_ACT = "gelu_tanh"
    return _GELU_ACT


# ----------------------------- Pallas kernels ------------------------------

def _matmul_bias_kernel(x_ref, w_ref, b_ref, o_ref, *, act):
    # Full-K block: single MXU contraction, no accumulator scratch / K grid axis.
    y = jnp.dot(x_ref[...], w_ref[...], preferred_element_type=jnp.float32)
    y = y + b_ref[...]
    if act == "tanh":
        y = jnp.tanh(y)
    elif act == "relu":
        y = jnp.maximum(y, 0.0)
    elif act == "gelu_erf":
        y = 0.5 * y * (1.0 + jax.lax.erf(y * 0.7071067811865476))
    elif act == "gelu_tanh":
        y = 0.5 * y * (1.0 + jnp.tanh(0.7978845608028654 * (y + 0.044715 * y * y * y)))
    o_ref[...] = y.astype(o_ref.dtype)


def matmul_bias(x, w, b, act="none", out_dtype=jnp.bfloat16):
    """act(x @ w + b); bf16 MXU inputs, f32 accumulation; full-K tiles."""
    M, K = x.shape
    N = w.shape[1]
    tm = _pick_tile(M, (512, 256, 128, 64, 32, 16, 8))
    tn = _pick_tile(N, (512, 256, 128))
    limit = _vmem_limit_bytes(((tm, K), jnp.bfloat16), ((K, tn), jnp.bfloat16),
                              ((1, tn), jnp.float32), ((tm, tn), out_dtype))
    return pl.pallas_call(
        functools.partial(_matmul_bias_kernel, act=act),
        out_shape=jax.ShapeDtypeStruct((M, N), out_dtype),
        grid=(M // tm, N // tn),
        in_specs=[
            pl.BlockSpec((tm, K), lambda i, j: (i, 0)),
            pl.BlockSpec((K, tn), lambda i, j: (0, j)),
            pl.BlockSpec((1, tn), lambda i, j: (0, j)),
        ],
        out_specs=pl.BlockSpec((tm, tn), lambda i, j: (i, j)),
        compiler_params=pltpu.CompilerParams(
            dimension_semantics=("parallel", "parallel"),
            vmem_limit_bytes=limit),
    )(x.astype(jnp.bfloat16), w.astype(jnp.bfloat16),
      b.astype(jnp.float32).reshape(1, N))


def _matmul_bias_ln_kernel(x_ref, w_ref, b_ref, r_ref, g_ref, be_ref, o_ref, *, eps):
    # matmul + bias + residual add + LayerNorm fused epilogue (full hidden dim in-block).
    y = jnp.dot(x_ref[...], w_ref[...], preferred_element_type=jnp.float32)
    y = y + b_ref[...] + r_ref[...].astype(jnp.float32)
    mean = jnp.mean(y, axis=-1, keepdims=True)
    cent = y - mean
    var = jnp.mean(cent * cent, axis=-1, keepdims=True)
    y = cent * jax.lax.rsqrt(var + eps)
    o_ref[...] = (y * g_ref[...] + be_ref[...]).astype(o_ref.dtype)


def matmul_bias_ln_residual(x, w, b, res, gamma, beta, eps=1e-12,
                            out_dtype=jnp.bfloat16):
    """LayerNorm((x @ w + b) + res) * gamma + beta; full-K, full-N(=hidden) blocks."""
    M, K = x.shape
    N = w.shape[1]
    tm = _pick_tile(M, (512, 256, 128, 64, 32, 16, 8))
    limit = _vmem_limit_bytes(((tm, K), jnp.bfloat16), ((K, N), jnp.bfloat16),
                              ((tm, N), jnp.bfloat16), ((tm, N), out_dtype),
                              ((1, N), jnp.float32), ((1, N), jnp.float32),
                              ((1, N), jnp.float32))
    return pl.pallas_call(
        functools.partial(_matmul_bias_ln_kernel, eps=eps),
        out_shape=jax.ShapeDtypeStruct((M, N), out_dtype),
        grid=(M // tm,),
        in_specs=[
            pl.BlockSpec((tm, K), lambda i: (i, 0)),
            pl.BlockSpec((K, N), lambda i: (0, 0)),
            pl.BlockSpec((1, N), lambda i: (0, 0)),
            pl.BlockSpec((tm, N), lambda i: (i, 0)),
            pl.BlockSpec((1, N), lambda i: (0, 0)),
            pl.BlockSpec((1, N), lambda i: (0, 0)),
        ],
        out_specs=pl.BlockSpec((tm, N), lambda i: (i, 0)),
        compiler_params=pltpu.CompilerParams(
            dimension_semantics=("parallel",),
            vmem_limit_bytes=limit),
    )(x.astype(jnp.bfloat16), w.astype(jnp.bfloat16),
      b.astype(jnp.float32).reshape(1, N), res,
      gamma.astype(jnp.float32).reshape(1, N),
      beta.astype(jnp.float32).reshape(1, N))


def _layernorm_kernel(x_ref, g_ref, b_ref, o_ref, *, eps):
    x = x_ref[...].astype(jnp.float32)
    mean = jnp.mean(x, axis=-1, keepdims=True)
    cent = x - mean
    var = jnp.mean(cent * cent, axis=-1, keepdims=True)
    y = cent * jax.lax.rsqrt(var + eps)
    o_ref[...] = (y * g_ref[...] + b_ref[...]).astype(o_ref.dtype)


def layernorm(x, gamma, beta, eps=1e-12, out_dtype=jnp.bfloat16):
    """LayerNorm(x) * gamma + beta (no residual), row-tiled; stats in f32."""
    M, H = x.shape
    tm = _pick_tile(M, (512, 256, 128, 64, 32, 16, 8))
    return pl.pallas_call(
        functools.partial(_layernorm_kernel, eps=eps),
        out_shape=jax.ShapeDtypeStruct((M, H), out_dtype),
        grid=(M // tm,),
        in_specs=[
            pl.BlockSpec((tm, H), lambda i: (i, 0)),
            pl.BlockSpec((1, H), lambda i: (0, 0)),
            pl.BlockSpec((1, H), lambda i: (0, 0)),
        ],
        out_specs=pl.BlockSpec((tm, H), lambda i: (i, 0)),
        compiler_params=pltpu.CompilerParams(dimension_semantics=("parallel",)),
    )(x, gamma.reshape(1, H), beta.reshape(1, H))


def _attention_kernel(q_ref, k_ref, v_ref, m_ref, o_ref, *, scale, dh, heads):
    add_mask = m_ref[0]                      # (1, S) additive key mask, f32
    qb = q_ref[0]                            # (S, heads*dh) bf16
    kb = k_ref[0]
    vb = v_ref[0]
    # Static unroll over heads; each head's context is written straight into its
    # output-ref slice (no concatenate -> no lane shuffle / extra VMEM copy).
    for h in range(heads):
        q = qb[:, h * dh:(h + 1) * dh]
        k = kb[:, h * dh:(h + 1) * dh]
        v = vb[:, h * dh:(h + 1) * dh]
        s = jax.lax.dot_general(q, k, (((1,), (1,)), ((), ())),
                                preferred_element_type=jnp.float32)
        s = s * scale + add_mask
        s = s - jnp.max(s, axis=-1, keepdims=True)
        p = jnp.exp(s)
        p = p * pl.reciprocal(jnp.sum(p, axis=-1, keepdims=True), approx=True)
        ctx = jnp.dot(p.astype(v.dtype), v, preferred_element_type=jnp.float32)
        o_ref[0, :, h * dh:(h + 1) * dh] = ctx.astype(o_ref.dtype)


def attention(qkv, add_mask, scale, nH, dh, H):
    """Multi-head self-attention on the packed qkv tensor.

    qkv: (B, S, 3H) packed [Q | K | V]; add_mask: (B, 1, S) additive.
    Q/K/V head-group blocks are carved out of the 3H lane dim by the BlockSpec
    index_maps -- no wrapper-side slicing (no extra HBM copies).
    """
    B, S, _ = qkv.shape
    G = _heads_per_block(nH, dh, S)
    gdh = G * dh
    kern = functools.partial(_attention_kernel, scale=scale, dh=dh, heads=G)

    if gdh % 128 == 0:
        nhg = H // gdh                       # head-group blocks per q/k/v tensor

        def spec(base):
            return pl.BlockSpec((1, S, gdh), lambda b, hg: (b, 0, base * nhg + hg))

        return pl.pallas_call(
            kern,
            out_shape=jax.ShapeDtypeStruct((B, S, H), jnp.bfloat16),
            grid=(B, nhg),
            in_specs=[spec(0), spec(1), spec(2),
                      pl.BlockSpec((1, 1, S), lambda b, hg: (b, 0, 0))],
            out_specs=pl.BlockSpec((1, S, gdh), lambda b, hg: (b, 0, hg)),
            compiler_params=pltpu.CompilerParams(
                dimension_semantics=("parallel", "parallel")),
        )(qkv, qkv, qkv, add_mask)

    # Fallback for tiny / non-128-aligned hidden sizes: slice q/k/v in the wrapper
    # (costs three (B,S,H) HBM copies) and use legal full-H blocks.
    q, k, v = qkv[..., :H], qkv[..., H:2 * H], qkv[..., 2 * H:]
    kern = functools.partial(_attention_kernel, scale=scale, dh=dh, heads=nH)
    full_spec = pl.BlockSpec((1, S, H), lambda b: (b, 0, 0))
    return pl.pallas_call(
        kern,
        out_shape=jax.ShapeDtypeStruct((B, S, H), jnp.bfloat16),
        grid=(B,),
        in_specs=[full_spec, full_spec, full_spec,
                  pl.BlockSpec((1, 1, S), lambda b: (b, 0, 0))],
        out_specs=full_spec,
        compiler_params=pltpu.CompilerParams(dimension_semantics=("parallel",)),
    )(q, k, v, add_mask)


def _pooler_head_kernel(cls_ref, pw_ref, pb_ref, fw_ref, fb_ref, o_ref):
    pooled = jnp.dot(cls_ref[...], pw_ref[...],
                     preferred_element_type=jnp.float32) + pb_ref[...]
    pooled = jnp.tanh(pooled).astype(pw_ref.dtype)
    score = jnp.dot(pooled, fw_ref[...],
                    preferred_element_type=jnp.float32) + fb_ref[...]
    o_ref[...] = jnp.maximum(score, 0.0)


def pooler_head(cls, pool_w, pool_b, fc_w, fc_b):
    """Fused BertPooler (tanh dense on CLS) + scorer head (relu Linear(H,1))."""
    B, H = cls.shape
    return pl.pallas_call(
        _pooler_head_kernel,
        out_shape=jax.ShapeDtypeStruct((B, 1), jnp.float32),
        grid=(1,),
        in_specs=[
            pl.BlockSpec((B, H), lambda i: (0, 0)),
            pl.BlockSpec((H, H), lambda i: (0, 0)),
            pl.BlockSpec((1, H), lambda i: (0, 0)),
            pl.BlockSpec((H, 1), lambda i: (0, 0)),
            pl.BlockSpec((1, 1), lambda i: (0, 0)),
        ],
        out_specs=pl.BlockSpec((B, 1), lambda i: (0, 0)),
    )(cls.astype(jnp.bfloat16), pool_w.astype(jnp.bfloat16),
      pool_b.astype(jnp.float32).reshape(1, H),
      fc_w.astype(jnp.bfloat16), fc_b.astype(jnp.float32).reshape(1, 1))


# ------------------------------ params / glue -------------------------------

def init_params(key, cfg):
    H, I, V, P, L = (cfg["hidden"], cfg["intermediate"], cfg["vocab"],
                     cfg["max_pos"], cfg["layers"])
    keys = iter(jax.random.split(key, 16 + 16 * L))
    nrm = lambda shape: jax.random.normal(next(keys), shape, jnp.float32) * 0.02
    params = dict(
        word_emb=nrm((V, H)),
        pos_emb=nrm((P, H)),
        type_emb=nrm((2, H)),
        emb_ln_g=jnp.ones((H,), jnp.float32), emb_ln_b=jnp.zeros((H,), jnp.float32),
        layers=[],
        pool_w=nrm((H, H)), pool_b=jnp.zeros((H,), jnp.float32),
        fc_w=nrm((H, 1)), fc_b=jnp.zeros((1,), jnp.float32),
    )
    for _ in range(L):
        params["layers"].append(dict(
            q_w=nrm((H, H)), q_b=jnp.zeros((H,), jnp.float32),
            k_w=nrm((H, H)), k_b=jnp.zeros((H,), jnp.float32),
            v_w=nrm((H, H)), v_b=jnp.zeros((H,), jnp.float32),
            ao_w=nrm((H, H)), ao_b=jnp.zeros((H,), jnp.float32),
            attn_ln_g=jnp.ones((H,), jnp.float32), attn_ln_b=jnp.zeros((H,), jnp.float32),
            i_w=nrm((H, I)), i_b=jnp.zeros((I,), jnp.float32),
            o_w=nrm((I, H)), o_b=jnp.zeros((H,), jnp.float32),
            out_ln_g=jnp.ones((H,), jnp.float32), out_ln_b=jnp.zeros((H,), jnp.float32),
        ))
    return params


def prepare_params(params):
    """Fuse Q/K/V weights and cast matmul weights to bf16 (biases / LN stay f32)."""
    bf = lambda a: a.astype(jnp.bfloat16)
    fast = dict(
        word_emb=params["word_emb"], pos_emb=params["pos_emb"],
        type_emb=params["type_emb"],
        emb_ln_g=params["emb_ln_g"], emb_ln_b=params["emb_ln_b"],
        pool_w=bf(params["pool_w"]), pool_b=params["pool_b"],
        fc_w=bf(params["fc_w"]), fc_b=params["fc_b"],
        layers=[],
    )
    for lp in params["layers"]:
        fast["layers"].append(dict(
            qkv_w=bf(jnp.concatenate([lp["q_w"], lp["k_w"], lp["v_w"]], axis=1)),
            qkv_b=jnp.concatenate([lp["q_b"], lp["k_b"], lp["v_b"]]),
            ao_w=bf(lp["ao_w"]), ao_b=lp["ao_b"],
            attn_ln_g=lp["attn_ln_g"], attn_ln_b=lp["attn_ln_b"],
            i_w=bf(lp["i_w"]), i_b=lp["i_b"],
            o_w=bf(lp["o_w"]), o_b=lp["o_b"],
            out_ln_g=lp["out_ln_g"], out_ln_b=lp["out_ln_b"],
        ))
    return fast


def sr_scorer_forward(params, cfg, input_ids, attention_mask, token_type_ids):
    B, S = input_ids.shape
    H = cfg["hidden"]
    nH = cfg["heads"]
    Dh = H // nH
    gelu = _gelu_act()

    # --- BertEmbeddings (gathers stay in plain JAX glue) ---
    pos_ids = jnp.arange(S, dtype=jnp.int32)
    emb = (params["word_emb"][input_ids]
           + params["pos_emb"][pos_ids][None, :, :]
           + params["type_emb"][token_type_ids])                   # (B, S, H) f32
    # cast to bf16 before the LN kernel (stats recomputed in f32 inside it)
    x = layernorm(emb.astype(jnp.bfloat16).reshape(B * S, H),
                  params["emb_ln_g"], params["emb_ln_b"])           # (B*S, H) bf16

    # extended additive attention mask, (B, 1, S): one copy per batch, not per head
    add_mask = ((1.0 - attention_mask.astype(jnp.float32)) * -10000.0
                ).reshape(B, 1, S)

    scale = 1.0 / math.sqrt(Dh)

    # --- BertEncoder ---
    for lp in params["layers"]:
        # fused QKV projection; packed (B, S, 3H) goes straight to attention
        qkv = matmul_bias(x, lp["qkv_w"], lp["qkv_b"]).reshape(B, S, 3 * H)
        ctx = attention(qkv, add_mask, scale, nH, Dh, H)            # (B, S, H) bf16
        # attention output proj + residual + LayerNorm fused in one kernel
        x = matmul_bias_ln_residual(ctx.reshape(B * S, H), lp["ao_w"], lp["ao_b"],
                                    x, lp["attn_ln_g"], lp["attn_ln_b"])
        # intermediate (fused exact GELU) then down-proj + residual + LN fused
        inter = matmul_bias(x, lp["i_w"], lp["i_b"], act=gelu)
        x = matmul_bias_ln_residual(inter, lp["o_w"], lp["o_b"],
                                    x, lp["out_ln_g"], lp["out_ln_b"])

    # --- fused BertPooler (tanh dense on CLS) + scorer head (relu Linear(H,1)) ---
    cls = x.reshape(B, S, H)[:, 0, :]                               # (B, H) bf16
    scores = pooler_head(cls, params["pool_w"], params["pool_b"],
                         params["fc_w"], params["fc_b"])
    return scores                                                   # (B, 1) f32


# ---------------------------------- main -----------------------------------

if __name__ == "__main__":
    # hidden=128 / heads=4 keeps head-group blocks 128-lane aligned (dh=32, G*dh=128)
    cfg = dict(hidden=128, intermediate=256, vocab=100, max_pos=16,
               layers=2, heads=4)
    key = jax.random.PRNGKey(0)
    pkey, ikey = jax.random.split(key)
    params = prepare_params(init_params(pkey, cfg))

    B, S = 2, 8
    input_ids = jax.random.randint(ikey, (B, S), 0, cfg["vocab"], dtype=jnp.int32)
    attention_mask = jnp.array([[1, 1, 1, 1, 1, 1, 1, 1],
                                [1, 1, 1, 1, 1, 1, 0, 0]], dtype=jnp.int32)
    token_type_ids = jnp.array([[0, 0, 0, 0, 1, 1, 1, 1],
                                [0, 0, 0, 0, 1, 1, 1, 1]], dtype=jnp.int32)

    scores = sr_scorer_forward(params, cfg, input_ids, attention_mask, token_type_ids)
    scores = jax.block_until_ready(scores)
    assert scores.shape == (B, 1) and scores.dtype == jnp.float32
    assert bool(jnp.all(scores >= 0.0))          # ReLU output
    print("KERNEL_OK")
</pallas_src>

<mosaic_0001>
module attributes {stable_mosaic.version = 11 : i64} {
  func.func @_probe(%arg0: memref<8x128xf32, #tpu.memory_space<vmem>>, %arg1: memref<8x128xf32, #tpu.memory_space<vmem>>) attributes {dimension_semantics = [], scalar_prefetch = 0 : i64, scratch_operands = 0 : i64, tpu.core_type = #tpu.core_type<tc>} {
    %c0 = arith.constant 0 : index
    %c0_0 = arith.constant 0 : index
    %0 = vector.load %arg0[%c0, %c0_0] : memref<8x128xf32, #tpu.memory_space<vmem>>, vector<8x128xf32>
    %1 = math.erf %0 : vector<8x128xf32>
    %c0_1 = arith.constant 0 : index
    %c0_2 = arith.constant 0 : index
    %2 = vector.load %arg1[%c0_1, %c0_2] : memref<8x128xf32, #tpu.memory_space<vmem>>, vector<8x128xf32>
    tpu.vector_store %arg1[%c0_1, %c0_2], %1 {strides = array<i32>} : memref<8x128xf32, #tpu.memory_space<vmem>>, vector<8x128xf32>,
    return
  }
}

module attributes {stable_mosaic.version = 11 : i64} {
  func.func @_layernorm_kernel(%arg0: i32, %arg1: memref<16x128xbf16, #tpu.memory_space<vmem>>, %arg2: memref<1x128xf32, #tpu.memory_space<vmem>>, %arg3: memref<1x128xf32, #tpu.memory_space<vmem>>, %arg4: memref<16x128xbf16, #tpu.memory_space<vmem>>) attributes {dimension_semantics = [#tpu.dimension_semantics<parallel>], iteration_bounds = array<i64: 1>, scalar_prefetch = 0 : i64, scratch_operands = 0 : i64, tpu.core_type = #tpu.core_type<tc>, window_params = [{transform_indices = @transform_0, window_bounds = array<i64: 16, 128>}, {pipeline_mode = #tpu.pipeline_mode<synchronous>, transform_indices = @transform_1, window_bounds = array<i64: 1, 128>}, {pipeline_mode = #tpu.pipeline_mode<synchronous>, transform_indices = @transform_2, window_bounds = array<i64: 1, 128>}, {transform_indices = @transform_3, window_bounds = array<i64: 16, 128>}]} {
    %c0 = arith.constant 0 : index
    %c0_0 = arith.constant 0 : index
    %0 = vector.load %arg1[%c0, %c0_0] : memref<16x128xbf16, #tpu.memory_space<vmem>>, vector<16x128xbf16>
    %1 = arith.extf %0 : vector<16x128xbf16> to vector<16x128xf32>
    %cst = arith.constant dense<0.000000e+00> : vector<16xf32>
    %2 = vector.multi_reduction <add>, %1, %cst [1] : vector<16x128xf32> to vector<16xf32>
    %3 = vector.shape_cast %2 : vector<16xf32> to vector<16x1xf32>
    %cst_1 = arith.constant 1.280000e+02 : f32
    %4 = vector.broadcast %cst_1 : f32 to vector<16x1xf32>
    %5 = arith.divf %3, %4 : vector<16x1xf32>
    %6 = vector.broadcast %5 : vector<16x1xf32> to vector<16x128xf32>
    %7 = arith.subf %1, %6 : vector<16x128xf32>
    %8 = arith.mulf %7, %7 : vector<16x128xf32>
    %cst_2 = arith.constant dense<0.000000e+00> : vector<16xf32>
    %9 = vector.multi_reduction <add>, %8, %cst_2 [1] : vector<16x128xf32> to vector<16xf32>
    %10 = vector.shape_cast %9 : vector<16xf32> to vector<16x1xf32>
    %cst_3 = arith.constant 1.280000e+02 : f32
    %11 = vector.broadcast %cst_3 : f32 to vector<16x1xf32>
    %12 = arith.divf %10, %11 : vector<16x1xf32>
    %cst_4 = arith.constant 9.99999996E-13 : f32
    %13 = vector.broadcast %cst_4 : f32 to vector<16x1xf32>
    %14 = arith.addf %12, %13 : vector<16x1xf32>
    %15 = math.rsqrt %14 : vector<16x1xf32>
    %16 = vector.broadcast %15 : vector<16x1xf32> to vector<16x128xf32>
    %17 = arith.mulf %7, %16 : vector<16x128xf32>
    %c0_5 = arith.constant 0 : index
    %c0_6 = arith.constant 0 : index
    %18 = vector.load %arg2[%c0_5, %c0_6] : memref<1x128xf32, #tpu.memory_space<vmem>>, vector<1x128xf32>
    %19 = vector.broadcast %18 : vector<1x128xf32> to vector<16x128xf32>
    %20 = arith.mulf %17, %19 : vector<16x128xf32>
    %c0_7 = arith.constant 0 : index
    %c0_8 = arith.constant 0 : index
    %21 = vector.load %arg3[%c0_7, %c0_8] : memref<1x128xf32, #tpu.memory_space<vmem>>, vector<1x128xf32>
    %22 = vector.broadcast %21 : vector<1x128xf32> to vector<16x128xf32>
    %23 = arith.addf %20, %22 : vector<16x128xf32>
    %24 = arith.truncf %23 : vector<16x128xf32> to vector<16x128xbf16>
    %c0_9 = arith.constant 0 : index
    %c0_10 = arith.constant 0 : index
    %25 = vector.load %arg4[%c0_9, %c0_10] : memref<16x128xbf16, #tpu.memory_space<vmem>>, vector<16x128xbf16>
    tpu.vector_store %arg4[%c0_9, %c0_10], %24 {strides = array<i32>} : memref<16x128xbf16, #tpu.memory_space<vmem>>, vector<16x128xbf16>,
    return
  }
  func.func @transform_0(%arg0: i32) -> (i32, i32) {
    %c0_i32 = arith.constant 0 : i32
    %c0_i32_0 = arith.constant 0 : i32
    return %arg0, %c0_i32 : i32, i32
  }
  func.func @transform_1(%arg0: i32) -> (i32, i32) {
    %c0_i32 = arith.constant 0 : i32
    %c0_i32_0 = arith.constant 0 : i32
    %c0_i32_1 = arith.constant 0 : i32
    return %c0_i32, %c0_i32_0 : i32, i32
  }
  func.func @transform_2(%arg0: i32) -> (i32, i32) {
    %c0_i32 = arith.constant 0 : i32
    %c0_i32_0 = arith.constant 0 : i32
    %c0_i32_1 = arith.constant 0 : i32
    return %c0_i32, %c0_i32_0 : i32, i32
  }
  func.func @transform_3(%arg0: i32) -> (i32, i32) {
    %c0_i32 = arith.constant 0 : i32
    %c0_i32_0 = arith.constant 0 : i32
    return %arg0, %c0_i32 : i32, i32
  }
}

</mosaic_0001>

<llo_original>
// kernel: tpu_custom_call.1
$region0: #{tpu_custom_call.1}
  #allocation0 [shape = 'u32[]', space=smem, size = 0x4, offset = 0x4, fixed_abs, tag = 'smem constant byte address 0x4 - core index']
  #allocation1 [shape = 'u32[144,128]{1,0:T(1,128)}', space=vmem, size = 0x12000, scoped, tag = 'internal scratch']
  %s0 = inlined_call_operand.hbm [shape: f32[8,128], index: 0, kind: input, shape index: {}]
  %s1 = inlined_call_operand.hbm [shape: f32[8,128], index: 1, kind: output, shape index: {}]
  %s2 = sld [smem:[#allocation0]]
  $region18: #{tpu_custom_call.1} parent=0
    _
  %s4 = ssub.s32 1, %s2
  %s5 = scalar_select 0, %s4, %s2
  $region1: #{tpu_custom_call.1} parent=0
    #allocation2 [shape = 'u8[4096]{0}', space=vmem, size = 0x1000, scoped, tag = 'input window, operand 0, single buffered']
    #allocation3 [shape = 's32[1]{0}', space=sflag, size = 0x4, scoped, tag = 'scoped memory for tpu_custom_call.1']
    #allocation4 [shape = 's32[1]{0}', space=sflag, size = 0x4, scoped, tag = 'scoped memory for tpu_custom_call.1']
    #allocation5 [shape = 'u8[4096]{0}', space=vmem, size = 0x1000, scoped, tag = 'output window, operand 0, single buffered']
    %6 = vsyncpa [#allocation3], 0
    %7 = vsyncpa [#allocation4], 0
    // Predicated region
    $region2: #{tpu_custom_call.1} parent=1 // pred_check
      _
    $region3: #{tpu_custom_call.1} parent=1 // pred_check_branch
      %9 = sbr.rel (0) target = $region5
    $region4: #{tpu_custom_call.1} parent=1 // pred_region
      %s11 = ssub.s32 128, 128
      %12 = vsyncadd [#allocation3], %s11
      %s14 = sshll.u32 [#allocation2], 4
      %s15 = int_to_ptr.vmem [resolvable:$true] %s14
      %17 = dma.hbm_to_vmem [thread:$0]  %s0, 128, %s15, [#allocation3]
    $region5: #{tpu_custom_call.1} parent=1 // pred_fallthru
      _
    // Predicated region
    $region6: #{tpu_custom_call.1} parent=1 // pred_check
      _
    $region7: #{tpu_custom_call.1} parent=1 // pred_check_branch
      %19 = sbr.rel (0) target = $region9
    $region8: #{tpu_custom_call.1} parent=1 // pred_region
      %20 = dma.done [#allocation3], 128
    $region9: #{tpu_custom_call.1} parent=1 // pred_fallthru
      _
    %v21 = vld [vmem:[#allocation2] sm:$0xff]
    %v22 = verf.f32.pop %v21
    %23 = vst [vmem:[#allocation5] sm:$0xff] %v22
    // Predicated region
    $region10: #{tpu_custom_call.1} parent=1 // pred_check
      _
    $region11: #{tpu_custom_call.1} parent=1 // pred_check_branch
      %25 = sbr.rel (0) target = $region13
    $region12: #{tpu_custom_call.1} parent=1 // pred_region
      %s27 = ssub.s32 128, 128
      %28 = vsyncadd [#allocation4], %s27
      %s30 = sshll.u32 [#allocation5], 4
      %s31 = int_to_ptr.vmem [resolvable:$true] %s30
      %33 = dma.vmem_to_hbm [thread:$0]  %s31, 128, %s1, [#allocation4]
    $region13: #{tpu_custom_call.1} parent=1 // pred_fallthru
      _
    // Predicated region
    $region14: #{tpu_custom_call.1} parent=1 // pred_check
      _
    $region15: #{tpu_custom_call.1} parent=1 // pred_check_branch
      %35 = sbr.rel (0) target = $region17
    $region16: #{tpu_custom_call.1} parent=1 // pred_region
      %36 = dma.done [#allocation4], 128
    $region17: #{tpu_custom_call.1} parent=1 // pred_fallthru
      _
    %37 = vsyncpa [#allocation3], 1
    %38 = vsyncpa [#allocation4], 1

// kernel: tpu_custom_call.1
$region0: #{tpu_custom_call.1}
  #allocation0 [shape = 'u32[]', space=smem, size = 0x4, offset = 0x4, fixed_abs, tag = 'smem constant byte address 0x4 - core index']
  #allocation1 [shape = 'u32[144,128]{1,0:T(1,128)}', space=vmem, size = 0x12000, scoped, tag = 'internal scratch']
  %s0 = inlined_call_operand.hbm [shape: bf16[16,128], index: 0, kind: input, shape index: {}]
  %s1 = inlined_call_operand.vmem [shape: f32[1,128], index: 1, kind: input, shape index: {}]
  %s2 = inlined_call_operand.vmem [shape: f32[1,128], index: 2, kind: input, shape index: {}]
  %s3 = inlined_call_operand.hbm [shape: bf16[16,128], index: 3, kind: output, shape index: {}]
  %s4 = sld [smem:[#allocation0]]
  $region26: #{tpu_custom_call.1} parent=0
    _
  %s6 = ssub.s32 1, %s4
  %s7 = scalar_select 0, %s6, %s4
  $region1: #{tpu_custom_call.1} parent=0
    #allocation2 [shape = 'u8[4096]{0}', space=vmem, size = 0x1000, scoped, tag = 'input window, operand 0, single buffered']
    #allocation3 [shape = 's32[1]{0}', space=sflag, size = 0x4, scoped, tag = 'scoped memory for tpu_custom_call.1']
    #allocation4 [shape = 's32[1]{0}', space=sflag, size = 0x4, scoped, tag = 'scoped memory for tpu_custom_call.1']
    #allocation5 [shape = 'u8[4096]{0}', space=vmem, size = 0x1000, scoped, tag = 'output window, operand 0, single buffered']
    %8 = vsyncpa [#allocation3], 0
    %9 = vsyncpa [#allocation4], 0
    // Predicated region
    $region2: #{tpu_custom_call.1} parent=1 // pred_check
      _
    $region3: #{tpu_custom_call.1} parent=1 // pred_check_branch
      %11 = sbr.rel (0) target = $region5
    $region4: #{tpu_custom_call.1} parent=1 // pred_region
      %s13 = ssub.s32 128, 128
      %14 = vsyncadd [#allocation3], %s13
      %s15 = sshll.u32 [#allocation2], 4
      %s16 = int_to_ptr.vmem [resolvable:$true] %s15
      %21 = dma.hbm_to_vmem [thread:$0]  %s0, 128, %s16, [#allocation3], 64, 64, 4
    $region5: #{tpu_custom_call.1} parent=1 // pred_fallthru
      _
    // Predicated region
    $region6: #{tpu_custom_call.1} parent=1 // pred_check
      _
    $region7: #{tpu_custom_call.1} parent=1 // pred_check_branch
      %23 = sbr.rel (0) target = $region9
    $region8: #{tpu_custom_call.1} parent=1 // pred_region
      _
    $region9: #{tpu_custom_call.1} parent=1 // pred_fallthru
      _
    // Predicated region
    $region10: #{tpu_custom_call.1} parent=1 // pred_check
      _
    $region11: #{tpu_custom_call.1} parent=1 // pred_check_branch
      %25 = sbr.rel (0) target = $region13
    $region12: #{tpu_custom_call.1} parent=1 // pred_region
      _
    $region13: #{tpu_custom_call.1} parent=1 // pred_fallthru
      _
    // Predicated region
    $region14: #{tpu_custom_call.1} parent=1 // pred_check
      _
    $region15: #{tpu_custom_call.1} parent=1 // pred_check_branch
      %27 = sbr.rel (0) target = $region17
    $region16: #{tpu_custom_call.1} parent=1 // pred_region
      %28 = dma.done [#allocation3], 128
    $region17: #{tpu_custom_call.1} parent=1 // pred_fallthru
      _
    %v29 = vld [vmem:[#allocation2] sm:$0xf]
    %v30 = vld [vmem:[#allocation2 + $0x4] sm:$0xf]
    %v31 = vunpack.c.l.bf16 %v29
    %v32 = vunpack.c.l.bf16 %v30
    %33 = vadd.xlane.f32.xlu0 %v31
    %v34 = vpop.xlane.xlu0 %33
    %35 = vadd.xlane.f32.xlu0 %v32
    %v36 = vpop.xlane.xlu0 %35
    %v37 = vrcp.pop 128.0
    %v38 = vmul.f32 %v34, %v37
    %v39 = vmul.f32 %v36, %v37
    %v40 = vsub.f32 %v31, %v38
    %v41 = vsub.f32 %v32, %v39
    %v42 = vmul.f32 %v40, %v40
    %v43 = vmul.f32 %v41, %v41
    %44 = vadd.xlane.f32.xlu0 %v42
    %v45 = vpop.xlane.xlu0 %44
    %46 = vadd.xlane.f32.xlu0 %v43
    %v47 = vpop.xlane.xlu0 %46
    %v48 = vmul.f32 %v45, %v37
    %v49 = vmul.f32 %v47, %v37
    %v50 = vadd.f32 %v48, 1e-12
    %v51 = vadd.f32 %v49, 1e-12
    %v52 = vrsqrt.pop %v50
    %v53 = vrsqrt.pop %v51
    %v54 = vmul.f32 %v40, %v52
    %v55 = vmul.f32 %v41, %v53
    %v56 = vld [vmem:[%s1] sm:$0x1]
    %v58 = vlaneseq
    %v59 = vshrl.u32 %v58, 7
    %v60 = vsub.s32 0, %v59
    %v61 = vrot.slane %v56, %v60
    %v63 = vmul.f32 %v54, %v61
    %v64 = vmul.f32 %v55, %v61
    %v65 = vld [vmem:[%s2] sm:$0x1]
    %v67 = vlaneseq
    %v68 = vshrl.u32 %v67, 7
    %v69 = vsub.s32 0, %v68
    %v70 = vrot.slane %v65, %v69
    %v72 = vadd.f32 %v63, %v70
    %v73 = vadd.f32 %v64, %v70
    %v74 = vpack.c.bf16 %v73, %v72
    %v76 = vunpack.c.l.b16 %v74
    %v77 = vunpack.c.h.b16 %v74
    %v78 = vpack.c.b16 %v76, %v76
    %v79 = vpack.c.b16 %v77, %v77
    %82 = vst [vmem:[#allocation5] sm:$0xf] %v78
    %83 = vst [vmem:[#allocation5 + $0x4] sm:$0xf] %v79
    // Predicated region
    $region18: #{tpu_custom_call.1} parent=1 // pred_check
      _
    $region19: #{tpu_custom_call.1} parent=1 // pred_check_branch
      %85 = sbr.rel (0) target = $region21
    $region20: #{tpu_custom_call.1} parent=1 // pred_region
      %s87 = ssub.s32 128, 128
      %88 = vsyncadd [#allocation4], %s87
      %s89 = sshll.u32 [#allocation5], 4
      %s90 = int_to_ptr.vmem [resolvable:$true] %s89
      %95 = dma.vmem_to_hbm [thread:$0]  %s90, 128, %s3, [#allocation4], 64, 64, 4
    $region21: #{tpu_custom_call.1} parent=1 // pred_fallthru
      _
    // Predicated region
    $region22: #{tpu_custom_call.1} parent=1 // pred_check
      _
    $region23: #{tpu_custom_call.1} parent=1 // pred_check_branch
      %97 = sbr.rel (0) target = $region25
    $region24: #{tpu_custom_call.1} parent=1 // pred_region
      %98 = dma.done [#allocation4], 128
    $region25: #{tpu_custom_call.1} parent=1 // pred_fallthru
      _
    %99 = vsyncpa [#allocation3], 1
    %100 = vsyncpa [#allocation4], 1

</llo_original>
